<compile_context>
chip_gen: v7x
topology: tpu7x:2x2x1
jax: 0.10.0
libtpu: 0.0.40
codegen_flags: <defaults>
</compile_context>

<pallas_src>
import functools

import jax
import jax.numpy as jnp
from jax.experimental import pallas as pl
from jax.experimental.pallas import tpu as pltpu


def _round_up(x, m):
    return (x + m - 1) // m * m


def _actor_critic_kernel(x_ref, w1_ref, b1_ref, w2_ref, b2_ref, w3_ref, b3_ref,
                         out_ref, *, action_dim):
    x = x_ref[...]                                             # [TB, S] f32

    # fused layer 1: both heads' first Linear + Tanh          -> [TB, 2*hp0]
    h = jnp.tanh(
        jnp.dot(x, w1_ref[...], preferred_element_type=jnp.float32) + b1_ref[...])
    # fused layer 2: block-diagonal Linear + Tanh             -> [TB, 2*hp1]
    h = jnp.tanh(
        jnp.dot(h, w2_ref[...], preferred_element_type=jnp.float32) + b2_ref[...])
    # fused layer 3: logits in lanes [0, A), value in lane A, zeros elsewhere
    z = jnp.dot(h, w3_ref[...], preferred_element_type=jnp.float32) + b3_ref[...]

    lane = jax.lax.broadcasted_iota(jnp.int32, z.shape, 1)     # [TB, OUT_W]
    is_prob = lane < action_dim

    # masked, max-stabilized softmax over the prob lanes only (exact divide).
    masked = jnp.where(is_prob, z, -1e30)
    m = jnp.max(masked, axis=-1, keepdims=True)
    e = jnp.where(is_prob, jnp.exp(masked - m), 0.0)
    probs = e / jnp.sum(e, axis=-1, keepdims=True)

    # lanes < A: probs ; lane == A: raw value ; lanes > A: 0 (probs is 0 there)
    out_ref[...] = jnp.where(lane == action_dim, z, probs)


def fuse_params(p, action_dim, *, min_head_width=64):
    """Pack both heads into 3 fused matmul weights.

    W1 = [aw1 | vw1], W2 = blockdiag(aw2, vw2), W3 packs aw3 (prob lanes) and
    vw3 (value lane) into one narrow [2*hp1, OUT_W] matrix.  Each head's hidden
    width is zero-padded to 64 so the fused hidden width is a full 128-lane
    vreg / one 128x128 MXU tile.  Padding is exact: zero cols + zero bias give
    tanh(0)=0, and the padded rows downstream are zero.
    """
    S, h0 = p["aw1"].shape
    h1 = p["aw2"].shape[1]
    assert p["vw1"].shape == (S, h0) and p["vw2"].shape == (h0, h1), (
        "block-diagonal fusion assumes identical actor/critic hidden widths")
    assert p["aw3"].shape == (h1, action_dim) and p["vw3"].shape == (h1, 1)

    hp0 = max(_round_up(h0, 8), min_head_width)
    hp1 = max(_round_up(h1, 8), min_head_width)
    out_w = _round_up(action_dim + 1, 8)

    w1 = jnp.zeros((S, 2 * hp0), jnp.float32)
    w1 = w1.at[:, :h0].set(p["aw1"]).at[:, hp0:hp0 + h0].set(p["vw1"])
    b1 = jnp.zeros((1, 2 * hp0), jnp.float32)
    b1 = b1.at[:, :h0].set(p["ab1"]).at[:, hp0:hp0 + h0].set(p["vb1"])

    w2 = jnp.zeros((2 * hp0, 2 * hp1), jnp.float32)
    w2 = w2.at[:h0, :h1].set(p["aw2"]).at[hp0:hp0 + h0, hp1:hp1 + h1].set(p["vw2"])
    b2 = jnp.zeros((1, 2 * hp1), jnp.float32)
    b2 = b2.at[:, :h1].set(p["ab2"]).at[:, hp1:hp1 + h1].set(p["vb2"])

    w3 = jnp.zeros((2 * hp1, out_w), jnp.float32)
    w3 = w3.at[:h1, :action_dim].set(p["aw3"])
    w3 = w3.at[hp1:hp1 + h1, action_dim:action_dim + 1].set(p["vw3"])
    b3 = jnp.zeros((1, out_w), jnp.float32)
    b3 = b3.at[:, :action_dim].set(p["ab3"])
    b3 = b3.at[:, action_dim:action_dim + 1].set(p["vb3"])

    return {"w1": w1, "b1": b1, "w2": w2, "b2": b2, "w3": w3, "b3": b3,
            "action_dim": action_dim, "out_w": out_w}


def actor_critic_forward(state, fused, *, block_b=4096):
    """Fused forward of both heads.

    state: [B, state_dim] f32
    fused: output of fuse_params
    returns (action_probs [B, action_dim], state_value [B]).
    """
    B, S = state.shape
    action_dim = fused["action_dim"]
    out_w = fused["out_w"]
    w1, b1 = fused["w1"], fused["b1"]
    w2, b2 = fused["w2"], fused["b2"]
    w3, b3 = fused["w3"], fused["b3"]

    # --- batch tile sizing --------------------------------------------------
    # Per-row pipelined VMEM = 2 * 4B * (S + out_w)  (double-buffered state+out).
    # Budget 16 MiB for the tiles -> well under v7x's 32 MiB scoped default /
    # 64 MiB physical VMEM; v5e/v6e (128 MiB) are trivially fine.
    tile_budget = 16 << 20
    tb_cap = max(8, (tile_budget // (2 * 4 * (S + out_w))) // 8 * 8)
    TB = min(_round_up(block_b, 8), _round_up(B, 8), tb_cap)
    Bp = _round_up(B, TB)
    if Bp != B:
        state = jnp.pad(state, ((0, Bp - B), (0, 0)))
    grid = (Bp // TB,)

    h_a = w1.shape[1]   # 2*hp0 (=128)
    h_b = w2.shape[1]   # 2*hp1 (=128)
    flops = 2 * Bp * (S * h_a + h_a * h_b + h_b * out_w)
    transcendentals = Bp * (h_a + h_b + out_w)      # two tanh layers + exp lanes
    weight_bytes = 4 * (w1.size + b1.size + w2.size + b2.size + w3.size + b3.size)
    bytes_accessed = 4 * (Bp * S + Bp * out_w) + weight_bytes

    const = lambda i: (0, 0)   # weights/biases stay VMEM-resident across steps

    out = pl.pallas_call(
        functools.partial(_actor_critic_kernel, action_dim=action_dim),
        out_shape=jax.ShapeDtypeStruct((Bp, out_w), jnp.float32),
        grid=grid,
        in_specs=[
            pl.BlockSpec((TB, S), lambda i: (i, 0)),     # state: batch-tiled
            pl.BlockSpec(w1.shape, const),
            pl.BlockSpec(b1.shape, const),
            pl.BlockSpec(w2.shape, const),
            pl.BlockSpec(b2.shape, const),
            pl.BlockSpec(w3.shape, const),
            pl.BlockSpec(b3.shape, const),
        ],
        out_specs=pl.BlockSpec((TB, out_w), lambda i: (i, 0)),
        compiler_params=pltpu.CompilerParams(
            # On v7x with grid > 1, CORE_PARALLEL / pl.core_map would shard the
            # batch grid across both TensorCores; plain "parallel" kept here.
            dimension_semantics=("parallel",),
            vmem_limit_bytes=32 << 20,
        ),
        cost_estimate=pl.CostEstimate(
            flops=flops,
            transcendentals=transcendentals,
            bytes_accessed=bytes_accessed,
        ),
    )(state, w1, b1, w2, b2, w3, b3)

    probs = out[:B, :action_dim]
    value = out[:B, action_dim]
    return probs, value


def init_params(key, state_dim, n_latent_var, action_dim):
    """PyTorch-style uniform(-1/sqrt(fan_in), 1/sqrt(fan_in)) init.

    Weights stored [in, out] (transpose of nn.Linear's [out, in])."""
    h0, h1 = n_latent_var
    dims_action = [(state_dim, h0), (h0, h1), (h1, action_dim)]
    dims_value = [(state_dim, h0), (h0, h1), (h1, 1)]
    params = {}
    for wname, bname, dims in [("aw", "ab", dims_action), ("vw", "vb", dims_value)]:
        for i, (fin, fout) in enumerate(dims, start=1):
            key, kw, kb = jax.random.split(key, 3)
            bound = 1.0 / jnp.sqrt(jnp.float32(fin))
            params[f"{wname}{i}"] = jax.random.uniform(
                kw, (fin, fout), jnp.float32, minval=-bound, maxval=bound)
            params[f"{bname}{i}"] = jax.random.uniform(
                kb, (1, fout), jnp.float32, minval=-bound, maxval=bound)
    return params


def _reference_forward(state, p):
    """Plain-JAX reference matching the PyTorch Sequential semantics."""
    dot = functools.partial(jnp.dot, precision=jax.lax.Precision.HIGHEST)
    h = jnp.tanh(dot(state, p["aw1"]) + p["ab1"])
    h = jnp.tanh(dot(h, p["aw2"]) + p["ab2"])
    probs = jax.nn.softmax(dot(h, p["aw3"]) + p["ab3"], axis=-1)

    v = jnp.tanh(dot(state, p["vw1"]) + p["vb1"])
    v = jnp.tanh(dot(v, p["vw2"]) + p["vb2"])
    value = dot(v, p["vw3"]) + p["vb3"]
    return probs, jnp.squeeze(value, axis=-1)


if __name__ == "__main__":
    # Small shapes consistent with the module: state_dim=16, n_latent_var=(32,32),
    # action_dim=8.  B=64 runs as a single grid step (grid=(1,)).
    B, state_dim, n_latent_var, action_dim = 64, 16, (32, 32), 8

    key = jax.random.PRNGKey(0)
    key, k_state = jax.random.split(key)
    state = jax.random.normal(k_state, (B, state_dim), jnp.float32)
    params = init_params(key, state_dim, n_latent_var, action_dim)
    fused = fuse_params(params, action_dim)

    probs, value = actor_critic_forward(state, fused)
    probs, value = jax.block_until_ready((probs, value))

    # Correctness check against the plain-JAX reference (all-f32 math + exact
    # softmax divide, so the match is tight).
    probs_ref, value_ref = _reference_forward(state, params)
    assert probs.shape == (B, action_dim) and value.shape == (B,)
    assert jnp.allclose(probs, probs_ref, atol=2e-3, rtol=2e-3)
    assert jnp.allclose(value, value_ref, atol=2e-3, rtol=2e-3)
    assert jnp.allclose(jnp.sum(probs, axis=-1), 1.0, atol=1e-3)

    print("KERNEL_OK")
</pallas_src>

<mosaic_0001>
module attributes {stable_mosaic.version = 11 : i64} {
  func.func @_actor_critic_kernel(%arg0: i32, %arg1: memref<64x16xf32, #tpu.memory_space<vmem>>, %arg2: memref<16x128xf32, #tpu.memory_space<vmem>>, %arg3: memref<1x128xf32, #tpu.memory_space<vmem>>, %arg4: memref<128x128xf32, #tpu.memory_space<vmem>>, %arg5: memref<1x128xf32, #tpu.memory_space<vmem>>, %arg6: memref<128x16xf32, #tpu.memory_space<vmem>>, %arg7: memref<1x16xf32, #tpu.memory_space<vmem>>, %arg8: memref<64x16xf32, #tpu.memory_space<vmem>>) attributes {dimension_semantics = [#tpu.dimension_semantics<parallel>], iteration_bounds = array<i64: 1>, scalar_prefetch = 0 : i64, scratch_operands = 0 : i64, tpu.core_type = #tpu.core_type<tc>, window_params = [{transform_indices = @transform_0, window_bounds = array<i64: 64, 16>}, {pipeline_mode = #tpu.pipeline_mode<synchronous>, transform_indices = @transform_1, window_bounds = array<i64: 16, 128>}, {pipeline_mode = #tpu.pipeline_mode<synchronous>, transform_indices = @transform_2, window_bounds = array<i64: 1, 128>}, {pipeline_mode = #tpu.pipeline_mode<synchronous>, transform_indices = @transform_3, window_bounds = array<i64: 128, 128>}, {pipeline_mode = #tpu.pipeline_mode<synchronous>, transform_indices = @transform_4, window_bounds = array<i64: 1, 128>}, {pipeline_mode = #tpu.pipeline_mode<synchronous>, transform_indices = @transform_5, window_bounds = array<i64: 128, 16>}, {pipeline_mode = #tpu.pipeline_mode<synchronous>, transform_indices = @transform_6, window_bounds = array<i64: 1, 16>}, {transform_indices = @transform_7, window_bounds = array<i64: 64, 16>}]} {
    %c0 = arith.constant 0 : index
    %c0_0 = arith.constant 0 : index
    %0 = vector.load %arg1[%c0, %c0_0] : memref<64x16xf32, #tpu.memory_space<vmem>>, vector<64x16xf32>
    %c0_1 = arith.constant 0 : index
    %c0_2 = arith.constant 0 : index
    %1 = vector.load %arg2[%c0_1, %c0_2] : memref<16x128xf32, #tpu.memory_space<vmem>>, vector<16x128xf32>
    %cst = arith.constant dense<0.000000e+00> : vector<64x128xf32>
    %2 = tpu.matmul %0, %1, %cst {dimension_numbers = #tpu.dot_dimension_numbers<[1], [0], [0], [1], [0, 0, 1, 1], [], []>} : vector<64x16xf32>, vector<16x128xf32>, vector<64x128xf32> -> vector<64x128xf32>
    %c0_3 = arith.constant 0 : index
    %c0_4 = arith.constant 0 : index
    %3 = vector.load %arg3[%c0_3, %c0_4] : memref<1x128xf32, #tpu.memory_space<vmem>>, vector<1x128xf32>
    %4 = vector.broadcast %3 : vector<1x128xf32> to vector<64x128xf32>
    %5 = arith.addf %2, %4 : vector<64x128xf32>
    %6 = math.tanh %5 : vector<64x128xf32>
    %c0_5 = arith.constant 0 : index
    %c0_6 = arith.constant 0 : index
    %7 = vector.load %arg4[%c0_5, %c0_6] : memref<128x128xf32, #tpu.memory_space<vmem>>, vector<128x128xf32>
    %cst_7 = arith.constant dense<0.000000e+00> : vector<64x128xf32>
    %8 = tpu.matmul %6, %7, %cst_7 {dimension_numbers = #tpu.dot_dimension_numbers<[1], [0], [0], [1], [0, 0, 1, 1], [], []>} : vector<64x128xf32>, vector<128x128xf32>, vector<64x128xf32> -> vector<64x128xf32>
    %c0_8 = arith.constant 0 : index
    %c0_9 = arith.constant 0 : index
    %9 = vector.load %arg5[%c0_8, %c0_9] : memref<1x128xf32, #tpu.memory_space<vmem>>, vector<1x128xf32>
    %10 = vector.broadcast %9 : vector<1x128xf32> to vector<64x128xf32>
    %11 = arith.addf %8, %10 : vector<64x128xf32>
    %12 = math.tanh %11 : vector<64x128xf32>
    %c0_10 = arith.constant 0 : index
    %c0_11 = arith.constant 0 : index
    %13 = vector.load %arg6[%c0_10, %c0_11] : memref<128x16xf32, #tpu.memory_space<vmem>>, vector<128x16xf32>
    %cst_12 = arith.constant dense<0.000000e+00> : vector<64x16xf32>
    %14 = tpu.matmul %12, %13, %cst_12 {dimension_numbers = #tpu.dot_dimension_numbers<[1], [0], [0], [1], [0, 0, 1, 1], [], []>} : vector<64x128xf32>, vector<128x16xf32>, vector<64x16xf32> -> vector<64x16xf32>
    %c0_13 = arith.constant 0 : index
    %c0_14 = arith.constant 0 : index
    %15 = vector.load %arg7[%c0_13, %c0_14] : memref<1x16xf32, #tpu.memory_space<vmem>>, vector<1x16xf32>
    %16 = vector.broadcast %15 : vector<1x16xf32> to vector<64x16xf32>
    %17 = arith.addf %14, %16 : vector<64x16xf32>
    %18 = tpu.iota {dimensions = array<i32: 1>} : vector<64x16xi32>
    %c8_i32 = arith.constant 8 : i32
    %19 = vector.broadcast %c8_i32 : i32 to vector<64x16xi32>
    %20 = arith.cmpi slt, %18, %19 : vector<64x16xi32>
    %cst_15 = arith.constant -1.000000e+30 : f32
    %21 = vector.broadcast %cst_15 : f32 to vector<64x16xf32>
    %22 = arith.select %20, %17, %21 : vector<64x16xi1>, vector<64x16xf32>
    %cst_16 = arith.constant dense<0xFF800000> : vector<64xf32>
    %23 = vector.multi_reduction <maximumf>, %22, %cst_16 [1] : vector<64x16xf32> to vector<64xf32>
    %24 = vector.shape_cast %23 : vector<64xf32> to vector<64x1xf32>
    %25 = vector.broadcast %24 : vector<64x1xf32> to vector<64x16xf32>
    %26 = arith.subf %22, %25 : vector<64x16xf32>
    %27 = math.exp %26 : vector<64x16xf32>
    %cst_17 = arith.constant 0.000000e+00 : f32
    %28 = vector.broadcast %cst_17 : f32 to vector<64x16xf32>
    %29 = arith.select %20, %27, %28 : vector<64x16xi1>, vector<64x16xf32>
    %cst_18 = arith.constant dense<0.000000e+00> : vector<64xf32>
    %30 = vector.multi_reduction <add>, %29, %cst_18 [1] : vector<64x16xf32> to vector<64xf32>
    %31 = vector.shape_cast %30 : vector<64xf32> to vector<64x1xf32>
    %32 = vector.broadcast %31 : vector<64x1xf32> to vector<64x16xf32>
    %33 = arith.divf %29, %32 : vector<64x16xf32>
    %c8_i32_19 = arith.constant 8 : i32
    %34 = vector.broadcast %c8_i32_19 : i32 to vector<64x16xi32>
    %35 = arith.cmpi eq, %18, %34 : vector<64x16xi32>
    %36 = arith.select %35, %17, %33 : vector<64x16xi1>, vector<64x16xf32>
    %c0_20 = arith.constant 0 : index
    %c0_21 = arith.constant 0 : index
    %37 = vector.load %arg8[%c0_20, %c0_21] : memref<64x16xf32, #tpu.memory_space<vmem>>, vector<64x16xf32>
    tpu.vector_store %arg8[%c0_20, %c0_21], %36 {strides = array<i32>} : memref<64x16xf32, #tpu.memory_space<vmem>>, vector<64x16xf32>,
    return
  }
  func.func @transform_0(%arg0: i32) -> (i32, i32) {
    %c0_i32 = arith.constant 0 : i32
    %c0_i32_0 = arith.constant 0 : i32
    return %arg0, %c0_i32 : i32, i32
  }
  func.func @transform_1(%arg0: i32) -> (i32, i32) {
    %c0_i32 = arith.constant 0 : i32
    %c0_i32_0 = arith.constant 0 : i32
    %c0_i32_1 = arith.constant 0 : i32
    return %c0_i32, %c0_i32_0 : i32, i32
  }
  func.func @transform_2(%arg0: i32) -> (i32, i32) {
    %c0_i32 = arith.constant 0 : i32
    %c0_i32_0 = arith.constant 0 : i32
    %c0_i32_1 = arith.constant 0 : i32
    return %c0_i32, %c0_i32_0 : i32, i32
  }
  func.func @transform_3(%arg0: i32) -> (i32, i32) {
    %c0_i32 = arith.constant 0 : i32
    %c0_i32_0 = arith.constant 0 : i32
    %c0_i32_1 = arith.constant 0 : i32
    return %c0_i32, %c0_i32_0 : i32, i32
  }
  func.func @transform_4(%arg0: i32) -> (i32, i32) {
    %c0_i32 = arith.constant 0 : i32
    %c0_i32_0 = arith.constant 0 : i32
    %c0_i32_1 = arith.constant 0 : i32
    return %c0_i32, %c0_i32_0 : i32, i32
  }
  func.func @transform_5(%arg0: i32) -> (i32, i32) {
    %c0_i32 = arith.constant 0 : i32
    %c0_i32_0 = arith.constant 0 : i32
    %c0_i32_1 = arith.constant 0 : i32
    return %c0_i32, %c0_i32_0 : i32, i32
  }
  func.func @transform_6(%arg0: i32) -> (i32, i32) {
    %c0_i32 = arith.constant 0 : i32
    %c0_i32_0 = arith.constant 0 : i32
    %c0_i32_1 = arith.constant 0 : i32
    return %c0_i32, %c0_i32_0 : i32, i32
  }
  func.func @transform_7(%arg0: i32) -> (i32, i32) {
    %c0_i32 = arith.constant 0 : i32
    %c0_i32_0 = arith.constant 0 : i32
    return %arg0, %c0_i32 : i32, i32
  }
}

</mosaic_0001>

<llo_original>
// kernel: tpu_custom_call.1
$region0: #{tpu_custom_call.1}
  #allocation0 [shape = 'u32[]', space=smem, size = 0x4, offset = 0x4, fixed_abs, tag = 'smem constant byte address 0x4 - core index']
  #allocation1 [shape = 'u32[144,128]{1,0:T(1,128)}', space=vmem, size = 0x12000, scoped, tag = 'internal scratch']
  %s0 = inlined_call_operand.vmem [shape: f32[64,16], index: 0, kind: input, shape index: {}]
  %s1 = inlined_call_operand.vmem [shape: f32[16,128], index: 1, kind: input, shape index: {}]
  %s2 = inlined_call_operand.vmem [shape: f32[1,128], index: 2, kind: input, shape index: {}]
  %s3 = inlined_call_operand.vmem [shape: f32[128,128], index: 3, kind: input, shape index: {}]
  %s4 = inlined_call_operand.vmem [shape: f32[1,128], index: 4, kind: input, shape index: {}]
  %s5 = inlined_call_operand.vmem [shape: f32[128,16], index: 5, kind: input, shape index: {}]
  %s6 = inlined_call_operand.vmem [shape: f32[1,16], index: 6, kind: input, shape index: {}]
  %s7 = inlined_call_operand.vmem [shape: f32[64,16], index: 7, kind: output, shape index: {}]
  %s8 = sld [smem:[#allocation0]]
  $region38: #{tpu_custom_call.1} parent=0
    _
  %s10 = ssub.s32 1, %s8
  %s11 = scalar_select 0, %s10, %s8
  // Predicated region
  $region2: #{tpu_custom_call.1} parent=0 // pred_check
    _
  $region3: #{tpu_custom_call.1} parent=0 // pred_check_branch
    %13 = sbr.rel (0) target = $region5
  $region4: #{tpu_custom_call.1} parent=0 // pred_region
    _
  $region5: #{tpu_custom_call.1} parent=0 // pred_fallthru
    _
  // Predicated region
  $region6: #{tpu_custom_call.1} parent=0 // pred_check
    _
  $region7: #{tpu_custom_call.1} parent=0 // pred_check_branch
    %15 = sbr.rel (0) target = $region9
  $region8: #{tpu_custom_call.1} parent=0 // pred_region
    _
  $region9: #{tpu_custom_call.1} parent=0 // pred_fallthru
    _
  // Predicated region
  $region10: #{tpu_custom_call.1} parent=0 // pred_check
    _
  $region11: #{tpu_custom_call.1} parent=0 // pred_check_branch
    %17 = sbr.rel (0) target = $region13
  $region12: #{tpu_custom_call.1} parent=0 // pred_region
    _
  $region13: #{tpu_custom_call.1} parent=0 // pred_fallthru
    _
  // Predicated region
  $region14: #{tpu_custom_call.1} parent=0 // pred_check
    _
  $region15: #{tpu_custom_call.1} parent=0 // pred_check_branch
    %19 = sbr.rel (0) target = $region17
  $region16: #{tpu_custom_call.1} parent=0 // pred_region
    _
  $region17: #{tpu_custom_call.1} parent=0 // pred_fallthru
    _
  // Predicated region
  $region18: #{tpu_custom_call.1} parent=0 // pred_check
    _
  $region19: #{tpu_custom_call.1} parent=0 // pred_check_branch
    %21 = sbr.rel (0) target = $region21
  $region20: #{tpu_custom_call.1} parent=0 // pred_region
    _
  $region21: #{tpu_custom_call.1} parent=0 // pred_fallthru
    _
  // Predicated region
  $region22: #{tpu_custom_call.1} parent=0 // pred_check
    _
  $region23: #{tpu_custom_call.1} parent=0 // pred_check_branch
    %23 = sbr.rel (0) target = $region25
  $region24: #{tpu_custom_call.1} parent=0 // pred_region
    _
  $region25: #{tpu_custom_call.1} parent=0 // pred_fallthru
    _
  // Predicated region
  $region26: #{tpu_custom_call.1} parent=0 // pred_check
    _
  $region27: #{tpu_custom_call.1} parent=0 // pred_check_branch
    %25 = sbr.rel (0) target = $region29
  $region28: #{tpu_custom_call.1} parent=0 // pred_region
    _
  $region29: #{tpu_custom_call.1} parent=0 // pred_fallthru
    _
  %v26 = vld [vmem:[%s0] sm:$0xff]
  %v27 = vld [vmem:[%s0 + $0x8] sm:$0xff]
  %v28 = vld [vmem:[%s0 + $0x10] sm:$0xff]
  %v29 = vld [vmem:[%s0 + $0x18] sm:$0xff]
  %v30 = vld [vmem:[%s0 + $0x20] sm:$0xff]
  %v31 = vld [vmem:[%s0 + $0x28] sm:$0xff]
  %v32 = vld [vmem:[%s0 + $0x30] sm:$0xff]
  %v33 = vld [vmem:[%s0 + $0x38] sm:$0xff]
  %v34 = vld [vmem:[%s1] sm:$0xff]
  %v35 = vld [vmem:[%s1 + $0x8] sm:$0xff]
  %v36 = vld [vmem:[%s2] sm:$0x1]
  %v38 = vlaneseq
  %v39 = vshrl.u32 %v38, 7
  %v40 = vsub.s32 0, %v39
  %v41 = vrot.slane %v36, %v40
  %vm43 = vcmask 130048
  %v45 = vsel %vm43, %v26, 0
  %v48 = vsel %vm43, %v27, 0
  %v51 = vsel %vm43, %v28, 0
  %v54 = vsel %vm43, %v29, 0
  %v57 = vsel %vm43, %v30, 0
  %v60 = vsel %vm43, %v31, 0
  %v63 = vsel %vm43, %v32, 0
  %v66 = vsel %vm43, %v33, 0
  %68 = vmatprep.subr.mxu0 0.0
  %69 = vmatpush1.msra.mxu0 %v34
  %70 = vmatprep.subr.mxu0 0.0
  %71 = vmatpush1.msra.mxu0 %v35
  %72 = vmatprep.subr.mxu0 0.0
  %73 = vmatpush1.msra.mxu0 0.0
  %74 = vmatprep.subr.mxu0 0.0
  %75 = vmatpush1.msra.mxu0 0.0
  %76 = vmatprep.subr.mxu0 0.0
  %77 = vmatpush1.msra.mxu0 0.0
  %78 = vmatprep.subr.mxu0 0.0
  %79 = vmatpush1.msra.mxu0 0.0
  %80 = vmatprep.subr.mxu0 0.0
  %81 = vmatpush1.msra.mxu0 0.0
  %82 = vmatprep.subr.mxu0 0.0
  %83 = vmatpush1.msra.mxu0 0.0
  %84 = vmatprep.subr.mxu0 0.0
  %85 = vmatpush1.msra.mxu0 0.0
  %86 = vmatprep.subr.mxu0 0.0
  %87 = vmatpush1.msra.mxu0 0.0
  %88 = vmatprep.subr.mxu0 0.0
  %89 = vmatpush1.msra.mxu0 0.0
  %90 = vmatprep.subr.mxu0 0.0
  %91 = vmatpush1.msra.mxu0 0.0
  %92 = vmatprep.subr.mxu0 0.0
  %93 = vmatpush1.msra.mxu0 0.0
  %94 = vmatprep.subr.mxu0 0.0
  %95 = vmatpush1.msra.mxu0 0.0
  %96 = vmatprep.subr.mxu0 0.0
  %97 = vmatpush1.msra.mxu0 0.0
  %98 = vmatprep.subr.mxu0 0.0
  %99 = vmatpush1.msra.mxu0 0.0
  %100 = vmatprep.subr.mxu0 0.0
  %101 = vmatpush1.msra.mxu0 0.0
  %102 = vmatprep.subr.mxu0 0.0
  %103 = vmatpush1.msra.mxu0 0.0
  %104 = vmatprep.subr.mxu0 0.0
  %105 = vmatpush1.msra.mxu0 0.0
  %106 = vmatprep.subr.mxu0 0.0
  %107 = vmatpush1.msra.mxu0 0.0
  %108 = vmatprep.subr.mxu0 0.0
  %109 = vmatpush1.msra.mxu0 0.0
  %110 = vmatprep.subr.mxu0 0.0
  %111 = vmatpush1.msra.mxu0 0.0
  %112 = vmatprep.subr.mxu0 0.0
  %113 = vmatpush1.msra.mxu0 0.0
  %114 = vmatprep.subr.mxu0 0.0
  %115 = vmatpush1.msra.mxu0 0.0
  %116 = vmatprep.subr.mxu0 0.0
  %117 = vmatpush1.msra.mxu0 0.0
  %118 = vmatprep.subr.mxu0 0.0
  %119 = vmatpush1.msra.mxu0 0.0
  %120 = vmatprep.subr.mxu0 0.0
  %121 = vmatpush1.msra.mxu0 0.0
  %122 = vmatprep.subr.mxu0 0.0
  %123 = vmatpush1.msra.mxu0 0.0
  %124 = vmatprep.subr.mxu0 0.0
  %125 = vmatpush1.msra.mxu0 0.0
  %126 = vmatprep.subr.mxu0 0.0
  %127 = vmatpush1.msra.mxu0 0.0
  %128 = vmatprep.subr.mxu0 0.0
  %129 = vmatpush1.msra.mxu0 0.0
  %130 = vmatprep.subr.mxu0 0.0
  %131 = vmatpush1.msra.mxu0 0.0
  %132 = vmatprep.mubr.f32.mxu0 0.0
  %133 = vmatmul.mubr.f32.gmra.mrb[0].mxu0 %v45
  %v134 = vpop.f32.mrb[0].mxu0
  %v135 = vadd.f32 %v41, %v134
  %v136 = vpop.f32.mrb[0].mxu0
  %137 = vmatprep.mubr.f32.mxu0 0.0
  %138 = vmatmul.mubr.f32.gmra.mrb[0].mxu0 %v48
  %v139 = vpop.f32.mrb[0].mxu0
  %v140 = vadd.f32 %v41, %v139
  %v141 = vpop.f32.mrb[0].mxu0
  %142 = vmatprep.mubr.f32.mxu0 0.0
  %143 = vmatmul.mubr.f32.gmra.mrb[0].mxu0 %v51
  %v144 = vpop.f32.mrb[0].mxu0
  %v145 = vadd.f32 %v41, %v144
  %v146 = vpop.f32.mrb[0].mxu0
  %147 = vmatprep.mubr.f32.mxu0 0.0
  %148 = vmatmul.mubr.f32.gmra.mrb[0].mxu0 %v54
  %v149 = vpop.f32.mrb[0].mxu0
  %v150 = vadd.f32 %v41, %v149
  %v151 = vpop.f32.mrb[0].mxu0
  %152 = vmatprep.mubr.f32.mxu0 0.0
  %153 = vmatmul.mubr.f32.gmra.mrb[0].mxu0 %v57
  %v154 = vpop.f32.mrb[0].mxu0
  %v155 = vadd.f32 %v41, %v154
  %v156 = vpop.f32.mrb[0].mxu0
  %157 = vmatprep.mubr.f32.mxu0 0.0
  %158 = vmatmul.mubr.f32.gmra.mrb[0].mxu0 %v60
  %v159 = vpop.f32.mrb[0].mxu0
  %v160 = vadd.f32 %v41, %v159
  %v161 = vpop.f32.mrb[0].mxu0
  %162 = vmatprep.mubr.f32.mxu0 0.0
  %163 = vmatmul.mubr.f32.gmra.mrb[0].mxu0 %v63
  %v164 = vpop.f32.mrb[0].mxu0
  %v165 = vadd.f32 %v41, %v164
  %v166 = vpop.f32.mrb[0].mxu0
  %167 = vmatprep.mubr.f32.mxu0 0.0
  %168 = vmatmul.mubr.f32.gmra.mrb[0].mxu0 %v66
  %v169 = vpop.f32.mrb[0].mxu0
  %v170 = vadd.f32 %v41, %v169
  %v171 = vpop.f32.mrb[0].mxu0
  %172 = vdwg.mxu0
  %v173 = vtanh.pop %v135
  %v174 = vtanh.pop %v140
  %v175 = vtanh.pop %v145
  %v176 = vtanh.pop %v150
  %v177 = vtanh.pop %v155
  %v178 = vtanh.pop %v160
  %v179 = vtanh.pop %v165
  %v180 = vtanh.pop %v170
  %v181 = vld [vmem:[%s3] sm:$0xff]
  %v182 = vld [vmem:[%s3 + $0x8] sm:$0xff]
  %v183 = vld [vmem:[%s3 + $0x10] sm:$0xff]
  %v184 = vld [vmem:[%s3 + $0x18] sm:$0xff]
  %v185 = vld [vmem:[%s3 + $0x20] sm:$0xff]
  %v186 = vld [vmem:[%s3 + $0x28] sm:$0xff]
  %v187 = vld [vmem:[%s3 + $0x30] sm:$0xff]
  %v188 = vld [vmem:[%s3 + $0x38] sm:$0xff]
  %v189 = vld [vmem:[%s3 + $0x40] sm:$0xff]
  %v190 = vld [vmem:[%s3 + $0x48] sm:$0xff]
  %v191 = vld [vmem:[%s3 + $0x50] sm:$0xff]
  %v192 = vld [vmem:[%s3 + $0x58] sm:$0xff]
  %v193 = vld [vmem:[%s3 + $0x60] sm:$0xff]
  %v194 = vld [vmem:[%s3 + $0x68] sm:$0xff]
  %v195 = vld [vmem:[%s3 + $0x70] sm:$0xff]
  %v196 = vld [vmem:[%s3 + $0x78] sm:$0xff]
  %v197 = vld [vmem:[%s4] sm:$0x1]
  %v199 = vlaneseq
  %v200 = vshrl.u32 %v199, 7
  %v201 = vsub.s32 0, %v200
  %v202 = vrot.slane %v197, %v201
  %204 = vmatprep.subr.mxu0 0.0
  %205 = vmatpush1.msra.mxu0 %v181
  %206 = vmatprep.subr.mxu0 0.0
  %207 = vmatpush1.msra.mxu0 %v182
  %208 = vmatprep.subr.mxu0 0.0
  %209 = vmatpush1.msra.mxu0 %v183
  %210 = vmatprep.subr.mxu0 0.0
  %211 = vmatpush1.msra.mxu0 %v184
  %212 = vmatprep.subr.mxu0 0.0
  %213 = vmatpush1.msra.mxu0 %v185
  %214 = vmatprep.subr.mxu0 0.0
  %215 = vmatpush1.msra.mxu0 %v186
  %216 = vmatprep.subr.mxu0 0.0
  %217 = vmatpush1.msra.mxu0 %v187
  %218 = vmatprep.subr.mxu0 0.0
  %219 = vmatpush1.msra.mxu0 %v188
  %220 = vmatprep.subr.mxu0 0.0
  %221 = vmatpush1.msra.mxu0 %v189
  %222 = vmatprep.subr.mxu0 0.0
  %223 = vmatpush1.msra.mxu0 %v190
  %224 = vmatprep.subr.mxu0 0.0
  %225 = vmatpush1.msra.mxu0 %v191
  %226 = vmatprep.subr.mxu0 0.0
  %227 = vmatpush1.msra.mxu0 %v192
  %228 = vmatprep.subr.mxu0 0.0
  %229 = vmatpush1.msra.mxu0 %v193
  %230 = vmatprep.subr.mxu0 0.0
  %231 = vmatpush1.msra.mxu0 %v194
  %232 = vmatprep.subr.mxu0 0.0
  %233 = vmatpush1.msra.mxu0 %v195
  %234 = vmatprep.subr.mxu0 0.0
  %235 = vmatpush1.msra.mxu0 %v196
  %236 = vmatprep.subr.mxu0 0.0
  %237 = vmatpush1.msra.mxu0 0.0
  %238 = vmatprep.subr.mxu0 0.0
  %239 = vmatpush1.msra.mxu0 0.0
  %240 = vmatprep.subr.mxu0 0.0
  %241 = vmatpush1.msra.mxu0 0.0
  %242 = vmatprep.subr.mxu0 0.0
  %243 = vmatpush1.msra.mxu0 0.0
  %244 = vmatprep.subr.mxu0 0.0
  %245 = vmatpush1.msra.mxu0 0.0
  %246 = vmatprep.subr.mxu0 0.0
  %247 = vmatpush1.msra.mxu0 0.0
  %248 = vmatprep.subr.mxu0 0.0
  %249 = vmatpush1.msra.mxu0 0.0
  %250 = vmatprep.subr.mxu0 0.0
  %251 = vmatpush1.msra.mxu0 0.0
  %252 = vmatprep.subr.mxu0 0.0
  %253 = vmatpush1.msra.mxu0 0.0
  %254 = vmatprep.subr.mxu0 0.0
  %255 = vmatpush1.msra.mxu0 0.0
  %256 = vmatprep.subr.mxu0 0.0
  %257 = vmatpush1.msra.mxu0 0.0
  %258 = vmatprep.subr.mxu0 0.0
  %259 = vmatpush1.msra.mxu0 0.0
  %260 = vmatprep.subr.mxu0 0.0
  %261 = vmatpush1.msra.mxu0 0.0
  %262 = vmatprep.subr.mxu0 0.0
  %263 = vmatpush1.msra.mxu0 0.0
  %264 = vmatprep.subr.mxu0 0.0
  %265 = vmatpush1.msra.mxu0 0.0
  %266 = vmatprep.subr.mxu0 0.0
  %267 = vmatpush1.msra.mxu0 0.0
  %268 = vmatprep.mubr.f32.mxu0 0.0
  %269 = vmatmul.mubr.f32.gmra.mrb[0].mxu0 %v173
  %v270 = vpop.f32.mrb[0].mxu0
  %v271 = vadd.f32 %v202, %v270
  %v272 = vpop.f32.mrb[0].mxu0
  %273 = vmatprep.mubr.f32.mxu0 0.0
  %274 = vmatmul.mubr.f32.gmra.mrb[0].mxu0 %v174
  %v275 = vpop.f32.mrb[0].mxu0
  %v276 = vadd.f32 %v202, %v275
  %v277 = vpop.f32.mrb[0].mxu0
  %278 = vmatprep.mubr.f32.mxu0 0.0
  %279 = vmatmul.mubr.f32.gmra.mrb[0].mxu0 %v175
  %v280 = vpop.f32.mrb[0].mxu0
  %v281 = vadd.f32 %v202, %v280
  %v282 = vpop.f32.mrb[0].mxu0
  %283 = vmatprep.mubr.f32.mxu0 0.0
  %284 = vmatmul.mubr.f32.gmra.mrb[0].mxu0 %v176
  %v285 = vpop.f32.mrb[0].mxu0
  %v286 = vadd.f32 %v202, %v285
  %v287 = vpop.f32.mrb[0].mxu0
  %288 = vmatprep.mubr.f32.mxu0 0.0
  %289 = vmatmul.mubr.f32.gmra.mrb[0].mxu0 %v177
  %v290 = vpop.f32.mrb[0].mxu0
  %v291 = vadd.f32 %v202, %v290
  %v292 = vpop.f32.mrb[0].mxu0
  %293 = vmatprep.mubr.f32.mxu0 0.0
  %294 = vmatmul.mubr.f32.gmra.mrb[0].mxu0 %v178
  %v295 = vpop.f32.mrb[0].mxu0
  %v296 = vadd.f32 %v202, %v295
  %v297 = vpop.f32.mrb[0].mxu0
  %298 = vmatprep.mubr.f32.mxu0 0.0
  %299 = vmatmul.mubr.f32.gmra.mrb[0].mxu0 %v179
  %v300 = vpop.f32.mrb[0].mxu0
  %v301 = vadd.f32 %v202, %v300
  %v302 = vpop.f32.mrb[0].mxu0
  %303 = vmatprep.mubr.f32.mxu0 0.0
  %304 = vmatmul.mubr.f32.gmra.mrb[0].mxu0 %v180
  %v305 = vpop.f32.mrb[0].mxu0
  %v306 = vadd.f32 %v202, %v305
  %v307 = vpop.f32.mrb[0].mxu0
  %308 = vdwg.mxu0
  %v309 = vtanh.pop %v271
  %v310 = vtanh.pop %v276
  %v311 = vtanh.pop %v281
  %v312 = vtanh.pop %v286
  %v313 = vtanh.pop %v291
  %v314 = vtanh.pop %v296
  %v315 = vtanh.pop %v301
  %v316 = vtanh.pop %v306
  %v317 = vld [vmem:[%s5] sm:$0xff]
  %v318 = vld [vmem:[%s5 + $0x8] sm:$0xff]
  %v319 = vld [vmem:[%s5 + $0x10] sm:$0xff]
  %v320 = vld [vmem:[%s5 + $0x18] sm:$0xff]
  %v321 = vld [vmem:[%s5 + $0x20] sm:$0xff]
  %v322 = vld [vmem:[%s5 + $0x28] sm:$0xff]
  %v323 = vld [vmem:[%s5 + $0x30] sm:$0xff]
  %v324 = vld [vmem:[%s5 + $0x38] sm:$0xff]
  %v325 = vld [vmem:[%s5 + $0x40] sm:$0xff]
  %v326 = vld [vmem:[%s5 + $0x48] sm:$0xff]
  %v327 = vld [vmem:[%s5 + $0x50] sm:$0xff]
  %v328 = vld [vmem:[%s5 + $0x58] sm:$0xff]
  %v329 = vld [vmem:[%s5 + $0x60] sm:$0xff]
  %v330 = vld [vmem:[%s5 + $0x68] sm:$0xff]
  %v331 = vld [vmem:[%s5 + $0x70] sm:$0xff]
  %v332 = vld [vmem:[%s5 + $0x78] sm:$0xff]
  %v333 = vld [vmem:[%s6] sm:$0x1]
  %v335 = vlaneseq
  %v336 = vshrl.u32 %v335, 7
  %v337 = vsub.s32 0, %v336
  %v338 = vrot.slane %v333, %v337
  %340 = vmatprep.subr.mxu0 0.0
  %341 = vmatpush1.msra.mxu0 %v317
  %342 = vmatprep.subr.mxu0 0.0
  %343 = vmatpush1.msra.mxu0 %v318
  %344 = vmatprep.subr.mxu0 0.0
  %345 = vmatpush1.msra.mxu0 %v319
  %346 = vmatprep.subr.mxu0 0.0
  %347 = vmatpush1.msra.mxu0 %v320
  %348 = vmatprep.subr.mxu0 0.0
  %349 = vmatpush1.msra.mxu0 %v321
  %350 = vmatprep.subr.mxu0 0.0
  %351 = vmatpush1.msra.mxu0 %v322
  %352 = vmatprep.subr.mxu0 0.0
  %353 = vmatpush1.msra.mxu0 %v323
  %354 = vmatprep.subr.mxu0 0.0
  %355 = vmatpush1.msra.mxu0 %v324
  %356 = vmatprep.subr.mxu0 0.0
  %357 = vmatpush1.msra.mxu0 %v325
  %358 = vmatprep.subr.mxu0 0.0
  %359 = vmatpush1.msra.mxu0 %v326
  %360 = vmatprep.subr.mxu0 0.0
  %361 = vmatpush1.msra.mxu0 %v327
  %362 = vmatprep.subr.mxu0 0.0
  %363 = vmatpush1.msra.mxu0 %v328
  %364 = vmatprep.subr.mxu0 0.0
  %365 = vmatpush1.msra.mxu0 %v329
  %366 = vmatprep.subr.mxu0 0.0
  %367 = vmatpush1.msra.mxu0 %v330
  %368 = vmatprep.subr.mxu0 0.0
  %369 = vmatpush1.msra.mxu0 %v331
  %370 = vmatprep.subr.mxu0 0.0
  %371 = vmatpush1.msra.mxu0 %v332
  %372 = vmatprep.subr.mxu0 0.0
  %373 = vmatpush1.msra.mxu0 0.0
  %374 = vmatprep.subr.mxu0 0.0
  %375 = vmatpush1.msra.mxu0 0.0
  %376 = vmatprep.subr.mxu0 0.0
  %377 = vmatpush1.msra.mxu0 0.0
  %378 = vmatprep.subr.mxu0 0.0
  %379 = vmatpush1.msra.mxu0 0.0
  %380 = vmatprep.subr.mxu0 0.0
  %381 = vmatpush1.msra.mxu0 0.0
  %382 = vmatprep.subr.mxu0 0.0
  %383 = vmatpush1.msra.mxu0 0.0
  %384 = vmatprep.subr.mxu0 0.0
  %385 = vmatpush1.msra.mxu0 0.0
  %386 = vmatprep.subr.mxu0 0.0
  %387 = vmatpush1.msra.mxu0 0.0
  %388 = vmatprep.subr.mxu0 0.0
  %389 = vmatpush1.msra.mxu0 0.0
  %390 = vmatprep.subr.mxu0 0.0
  %391 = vmatpush1.msra.mxu0 0.0
  %392 = vmatprep.subr.mxu0 0.0
  %393 = vmatpush1.msra.mxu0 0.0
  %394 = vmatprep.subr.mxu0 0.0
  %395 = vmatpush1.msra.mxu0 0.0
  %396 = vmatprep.subr.mxu0 0.0
  %397 = vmatpush1.msra.mxu0 0.0
  %398 = vmatprep.subr.mxu0 0.0
  %399 = vmatpush1.msra.mxu0 0.0
  %400 = vmatprep.subr.mxu0 0.0
  %401 = vmatpush1.msra.mxu0 0.0
  %402 = vmatprep.subr.mxu0 0.0
  %403 = vmatpush1.msra.mxu0 0.0
  %404 = vmatprep.mubr.f32.mxu0 0.0
  %405 = vmatmul.mubr.f32.gmra.mrb[0].mxu0 %v309
  %v406 = vpop.f32.mrb[0].mxu0
  %v407 = vadd.f32 %v338, %v406
  %v408 = vpop.f32.mrb[0].mxu0
  %409 = vmatprep.mubr.f32.mxu0 0.0
  %410 = vmatmul.mubr.f32.gmra.mrb[0].mxu0 %v310
  %v411 = vpop.f32.mrb[0].mxu0
  %v412 = vadd.f32 %v338, %v411
  %v413 = vpop.f32.mrb[0].mxu0
  %414 = vmatprep.mubr.f32.mxu0 0.0
  %415 = vmatmul.mubr.f32.gmra.mrb[0].mxu0 %v311
  %v416 = vpop.f32.mrb[0].mxu0
  %v417 = vadd.f32 %v338, %v416
  %v418 = vpop.f32.mrb[0].mxu0
  %419 = vmatprep.mubr.f32.mxu0 0.0
  %420 = vmatmul.mubr.f32.gmra.mrb[0].mxu0 %v312
  %v421 = vpop.f32.mrb[0].mxu0
  %v422 = vadd.f32 %v338, %v421
  %v423 = vpop.f32.mrb[0].mxu0
  %424 = vmatprep.mubr.f32.mxu0 0.0
  %425 = vmatmul.mubr.f32.gmra.mrb[0].mxu0 %v313
  %v426 = vpop.f32.mrb[0].mxu0
  %v427 = vadd.f32 %v338, %v426
  %v428 = vpop.f32.mrb[0].mxu0
  %429 = vmatprep.mubr.f32.mxu0 0.0
  %430 = vmatmul.mubr.f32.gmra.mrb[0].mxu0 %v314
  %v431 = vpop.f32.mrb[0].mxu0
  %v432 = vadd.f32 %v338, %v431
  %v433 = vpop.f32.mrb[0].mxu0
  %434 = vmatprep.mubr.f32.mxu0 0.0
  %435 = vmatmul.mubr.f32.gmra.mrb[0].mxu0 %v315
  %v436 = vpop.f32.mrb[0].mxu0
  %v437 = vadd.f32 %v338, %v436
  %v438 = vpop.f32.mrb[0].mxu0
  %439 = vmatprep.mubr.f32.mxu0 0.0
  %440 = vmatmul.mubr.f32.gmra.mrb[0].mxu0 %v316
  %v441 = vpop.f32.mrb[0].mxu0
  %v442 = vadd.f32 %v338, %v441
  %v443 = vpop.f32.mrb[0].mxu0
  %444 = vdwg.mxu0
  %v445 = vlaneseq
  %v446 = vand.u32 %v445, 127
  %vm447 = vcmp.lt.s32.totalorder %v446, 8
  %v448 = vsel %vm447, %v407, -1e+30
  %v449 = vsel %vm447, %v412, -1e+30
  %v450 = vsel %vm447, %v417, -1e+30
  %v451 = vsel %vm447, %v422, -1e+30
  %v452 = vsel %vm447, %v427, -1e+30
  %v453 = vsel %vm447, %v432, -1e+30
  %v454 = vsel %vm447, %v437, -1e+30
  %v455 = vsel %vm447, %v442, -1e+30
  %v456 = vsel %vm43, %v448, -inf
  %457 = vmax.xlane.f32.xlu0 %v456
  %v458 = vpop.xlane.xlu0 %457
  %v459 = vsel %vm43, %v449, -inf
  %460 = vmax.xlane.f32.xlu0 %v459
  %v461 = vpop.xlane.xlu0 %460
  %v462 = vsel %vm43, %v450, -inf
  %463 = vmax.xlane.f32.xlu0 %v462
  %v464 = vpop.xlane.xlu0 %463
  %v465 = vsel %vm43, %v451, -inf
  %466 = vmax.xlane.f32.xlu0 %v465
  %v467 = vpop.xlane.xlu0 %466
  %v468 = vsel %vm43, %v452, -inf
  %469 = vmax.xlane.f32.xlu0 %v468
  %v470 = vpop.xlane.xlu0 %469
  %v471 = vsel %vm43, %v453, -inf
  %472 = vmax.xlane.f32.xlu0 %v471
  %v473 = vpop.xlane.xlu0 %472
  %v474 = vsel %vm43, %v454, -inf
  %475 = vmax.xlane.f32.xlu0 %v474
  %v476 = vpop.xlane.xlu0 %475
  %v477 = vsel %vm43, %v455, -inf
  %478 = vmax.xlane.f32.xlu0 %v477
  %v479 = vpop.xlane.xlu0 %478
  %v480 = vsub.f32 %v448, %v458
  %v481 = vsub.f32 %v449, %v461
  %v482 = vsub.f32 %v450, %v464
  %v483 = vsub.f32 %v451, %v467
  %v484 = vsub.f32 %v452, %v470
  %v485 = vsub.f32 %v453, %v473
  %v486 = vsub.f32 %v454, %v476
  %v487 = vsub.f32 %v455, %v479
  %v488 = vmul.f32 %v480, 1.442695
  %v489 = vpow.pop %v488
  %v490 = vmul.f32 %v481, 1.442695
  %v491 = vpow.pop %v490
  %v492 = vmul.f32 %v482, 1.442695
  %v493 = vpow.pop %v492
  %v494 = vmul.f32 %v483, 1.442695
  %v495 = vpow.pop %v494
  %v496 = vmul.f32 %v484, 1.442695
  %v497 = vpow.pop %v496
  %v498 = vmul.f32 %v485, 1.442695
  %v499 = vpow.pop %v498
  %v500 = vmul.f32 %v486, 1.442695
  %v501 = vpow.pop %v500
  %v502 = vmul.f32 %v487, 1.442695
  %v503 = vpow.pop %v502
  %v504 = vsel %vm447, %v489, 0.0
  %v505 = vsel %vm447, %v491, 0.0
  %v506 = vsel %vm447, %v493, 0.0
  %v507 = vsel %vm447, %v495, 0.0
  %v508 = vsel %vm447, %v497, 0.0
  %v509 = vsel %vm447, %v499, 0.0
  %v510 = vsel %vm447, %v501, 0.0
  %v511 = vsel %vm447, %v503, 0.0
  %v512 = vsel %vm43, %v504, 0.0
  %513 = vadd.xlane.f32.xlu0 %v512
  %v514 = vpop.xlane.xlu0 %513
  %v515 = vsel %vm43, %v505, 0.0
  %516 = vadd.xlane.f32.xlu0 %v515
  %v517 = vpop.xlane.xlu0 %516
  %v518 = vsel %vm43, %v506, 0.0
  %519 = vadd.xlane.f32.xlu0 %v518
  %v520 = vpop.xlane.xlu0 %519
  %v521 = vsel %vm43, %v507, 0.0
  %522 = vadd.xlane.f32.xlu0 %v521
  %v523 = vpop.xlane.xlu0 %522
  %v524 = vsel %vm43, %v508, 0.0
  %525 = vadd.xlane.f32.xlu0 %v524
  %v526 = vpop.xlane.xlu0 %525
  %v527 = vsel %vm43, %v509, 0.0
  %528 = vadd.xlane.f32.xlu0 %v527
  %v529 = vpop.xlane.xlu0 %528
  %v530 = vsel %vm43, %v510, 0.0
  %531 = vadd.xlane.f32.xlu0 %v530
  %v532 = vpop.xlane.xlu0 %531
  %v533 = vsel %vm43, %v511, 0.0
  %534 = vadd.xlane.f32.xlu0 %v533
  %v535 = vpop.xlane.xlu0 %534
  %v536 = vrcp.pop %v514
  %v537 = vmul.f32 %v504, %v536
  %v538 = vrcp.pop %v517
  %v539 = vmul.f32 %v505, %v538
  %v540 = vrcp.pop %v520
  %v541 = vmul.f32 %v506, %v540
  %v542 = vrcp.pop %v523
  %v543 = vmul.f32 %v507, %v542
  %v544 = vrcp.pop %v526
  %v545 = vmul.f32 %v508, %v544
  %v546 = vrcp.pop %v529
  %v547 = vmul.f32 %v509, %v546
  %v548 = vrcp.pop %v532
  %v549 = vmul.f32 %v510, %v548
  %v550 = vrcp.pop %v535
  %v551 = vmul.f32 %v511, %v550
  %vm552 = vcmp.eq.s32.totalorder %v446, 8
  %v553 = vsel %vm552, %v407, %v537
  %v554 = vsel %vm552, %v412, %v539
  %v555 = vsel %vm552, %v417, %v541
  %v556 = vsel %vm552, %v422, %v543
  %v557 = vsel %vm552, %v427, %v545
  %v558 = vsel %vm552, %v432, %v547
  %v559 = vsel %vm552, %v437, %v549
  %v560 = vsel %vm552, %v442, %v551
  %561 = vst.msk [vmem:[%s7] sm:$0xff] %vm43, %v553
  %562 = vst.msk [vmem:[%s7 + $0x8] sm:$0xff] %vm43, %v554
  %563 = vst.msk [vmem:[%s7 + $0x10] sm:$0xff] %vm43, %v555
  %564 = vst.msk [vmem:[%s7 + $0x18] sm:$0xff] %vm43, %v556
  %565 = vst.msk [vmem:[%s7 + $0x20] sm:$0xff] %vm43, %v557
  %566 = vst.msk [vmem:[%s7 + $0x28] sm:$0xff] %vm43, %v558
  %567 = vst.msk [vmem:[%s7 + $0x30] sm:$0xff] %vm43, %v559
  %568 = vst.msk [vmem:[%s7 + $0x38] sm:$0xff] %vm43, %v560
  // Predicated region
  $region30: #{tpu_custom_call.1} parent=0 // pred_check
    _
  $region31: #{tpu_custom_call.1} parent=0 // pred_check_branch
    %570 = sbr.rel (0) target = $region33
  $region32: #{tpu_custom_call.1} parent=0 // pred_region
    _
  $region33: #{tpu_custom_call.1} parent=0 // pred_fallthru
    _
  // Predicated region
  $region34: #{tpu_custom_call.1} parent=0 // pred_check
    _
  $region35: #{tpu_custom_call.1} parent=0 // pred_check_branch
    %572 = sbr.rel (0) target = $region37
  $region36: #{tpu_custom_call.1} parent=0 // pred_region
    _
  $region37: #{tpu_custom_call.1} parent=0 // pred_fallthru
    _

</llo_original>
